<compile_context>
chip_gen: v5e
topology: v5e:2x2
jax: 0.10.0
libtpu: 0.0.40
codegen_flags: <defaults>
</compile_context>

<pallas_src>
import functools

import jax
import jax.numpy as jnp
from jax.experimental import pallas as pl
from jax.experimental.pallas import tpu as pltpu


# ---------------------------------------------------------------------------
# Pallas kernel: full fused forward for one batch tile (batch on lanes)
# ---------------------------------------------------------------------------
def _credal_kernel(
    slab_ref,     # (C + M*K, TB)   fused [x ; p_preds] slab, streaming dtype
    w_in_ref,     # (H, C)          transposed MLP input weight
    b_in_ref,     # (H, 1)
    w_hid_ref,    # (L, H, H)       transposed hidden weights
    b_hid_ref,    # (L, H, 1)
    w_out_ref,    # (M, H)
    b_out_ref,    # (M, 1)
    w_cal_ref,    # (K, K)          transposed calibration weight
    b_cal_ref,    # (K, 1)
    out_ref,      # (2K + M, TB)    packed output: [p_cal ; p_bar ; weights_l]
    *,
    hidden_layers: int,
    n_ensembles: int,
    n_classes: int,
    in_channels: int,
):
    C, M, K = in_channels, n_ensembles, n_classes
    tb = slab_ref.shape[1]

    slab = slab_ref[...]                       # streaming dtype (f32 or bf16)
    x_t = slab[:C, :]                          # (C, TB)
    pflat = slab[C:, :].astype(jnp.float32)    # (M*K, TB)

    # ---- comb_model: MLP (weights = MXU LHS, batch on lanes) ---------------
    h = jnp.dot(w_in_ref[...], x_t, preferred_element_type=jnp.float32)
    h = jnp.maximum(h + b_in_ref[...], 0.0)                       # (H, TB) f32
    for l in range(hidden_layers):             # static unroll; L is compile-time
        h = jnp.dot(w_hid_ref[l], h.astype(w_hid_ref.dtype),
                    preferred_element_type=jnp.float32)
        h = jnp.maximum(h + b_hid_ref[l], 0.0)
    logits = jnp.dot(w_out_ref[...], h.astype(w_out_ref.dtype),
                     preferred_element_type=jnp.float32) + b_out_ref[...]

    # softmax over ensembles (sublane axis, M rows)
    mx = jnp.max(logits, axis=0, keepdims=True)
    e = jnp.exp(logits - mx)
    inv = pl.reciprocal(jnp.sum(e, axis=0, keepdims=True), approx=True)
    weights_l = e * inv                                            # (M, TB) f32

    # ---- calculate_pbar: static VPU FMA loop over ensemble members ---------
    p_bar = jnp.zeros((K, tb), jnp.float32)
    for m in range(M):                          # static unroll, M small
        p_bar = p_bar + weights_l[m:m + 1, :] * pflat[m * K:(m + 1) * K, :]

    # ---- cal_model: Dirichlet calibration on log-probabilities -------------
    z = jnp.dot(w_cal_ref[...], jnp.log(p_bar + 1e-12),
                preferred_element_type=jnp.float32) + b_cal_ref[...]
    mz = jnp.max(z, axis=0, keepdims=True)
    ez = jnp.exp(z - mz)
    invz = pl.reciprocal(jnp.sum(ez, axis=0, keepdims=True), approx=True)
    p_cal = ez * invz                                              # (K, TB)

    # lane-dense writeback: direct sub-slice stores (no concatenate temp)
    out_ref[0:K, :] = p_cal.astype(out_ref.dtype)
    out_ref[K:2 * K, :] = p_bar.astype(out_ref.dtype)
    out_ref[2 * K:2 * K + M, :] = weights_l.astype(out_ref.dtype)


# ---------------------------------------------------------------------------
# Wrapper
# ---------------------------------------------------------------------------
def _choose_tile_b(n: int) -> int:
    """Batch (lane) tile: multiple of 128, big (amortize ~0.35us/step), and an
    even grid length when cheap (v7x megacore balance)."""
    if n <= 128:
        return 128
    candidates = (2048, 1024, 512, 256, 128)

    def waste(t):
        return pl.cdiv(n, t) * t - n

    max_waste = max(128, n // 8)
    for t in candidates:                         # prefer even grid, low waste
        if pl.cdiv(n, t) % 2 == 0 and waste(t) <= max_waste:
            return t
    for t in candidates:                         # else largest low-waste tile
        if waste(t) <= max_waste:
            return t
    return 128


def credal_set_calibrator(x, p_preds, params, *, hidden_layers: int,
                          tile_b: int | None = None, input_dtype=None):
    N, C = x.shape
    _, M, K = p_preds.shape
    H = params["w_in"].shape[1]
    L = params["w_hid"].shape[0]
    assert L == hidden_layers

    # Fused, transposed input slab: rows = [x features ; ensemble probs],
    # columns = batch (lanes). One streaming DMA per grid step.
    slab = jnp.concatenate([x, p_preds.reshape(N, M * K)], axis=1)   # (N, C+MK)

    # Transposed parameters (weights become the small MXU LHS).
    w_in_t = params["w_in"].T                                  # (H, C)
    b_in_t = params["b_in"].reshape(1, H).T                    # (H, 1)
    w_hid_t = jnp.transpose(params["w_hid"], (0, 2, 1))        # (L, H, H)
    b_hid_t = jnp.transpose(params["b_hid"].reshape(L, 1, H), (0, 2, 1))  # (L, H, 1)
    w_out_t = params["w_out"].T                                # (M, H)
    b_out_t = params["b_out"].reshape(1, M).T                  # (M, 1)
    w_cal_t = params["w_cal"].T                                # (K, K)
    b_cal_t = params["b_cal"].reshape(1, K).T                  # (K, 1)

    if input_dtype is not None:
        # e.g. jnp.bfloat16 on v6e/v7x: halves streaming HBM bytes and uses the
        # native bf16 MXU path; f32 accumulation / softmax / log kept in-kernel.
        slab = slab.astype(input_dtype)
        w_in_t = w_in_t.astype(input_dtype)
        w_hid_t = w_hid_t.astype(input_dtype)
        w_out_t = w_out_t.astype(input_dtype)

    if tile_b is None:
        tile_b = _choose_tile_b(N)

    # Pad the batch (lane) axis to a tile multiple; padded columns discarded.
    Np = pl.cdiv(N, tile_b) * tile_b
    if Np != N:
        slab = jnp.pad(slab, ((0, Np - N), (0, 0)))
    slab = slab.T                                              # (C+MK, Np)

    grid = (Np // tile_b,)
    Wrows = 2 * K + M            # packed output rows: p_cal | p_bar | weights_l

    # Parameters are tiny: keep them fully resident (block = full array).
    def full(shape):
        return pl.BlockSpec(shape, lambda i: (0,) * len(shape))

    in_specs = [
        pl.BlockSpec((C + M * K, tile_b), lambda i: (0, i)),   # fused slab
        full((H, C)), full((H, 1)),                            # w_in, b_in
        full((L, H, H)), full((L, H, 1)),                      # w_hid, b_hid
        full((M, H)), full((M, 1)),                            # w_out, b_out
        full((K, K)), full((K, 1)),                            # w_cal, b_cal
    ]
    out_specs = pl.BlockSpec((Wrows, tile_b), lambda i: (0, i))
    out_shape = jax.ShapeDtypeStruct((Wrows, Np), jnp.float32)

    kernel = functools.partial(_credal_kernel, hidden_layers=hidden_layers,
                               n_ensembles=M, n_classes=K, in_channels=C)

    # Advisory cost hint for XLA scheduling when embedded in a larger jit.
    flops = 2 * Np * (C * H + L * H * H + H * M + K * K) + 2 * Np * M * K
    transcendentals = Np * (M + 2 * K)
    param_bytes = sum(int(a.size) * a.dtype.itemsize for a in
                      (w_in_t, b_in_t, w_hid_t, b_hid_t,
                       w_out_t, b_out_t, w_cal_t, b_cal_t))
    bytes_accessed = (int(slab.size) * slab.dtype.itemsize
                      + Wrows * Np * 4 + param_bytes)
    cost = pl.CostEstimate(flops=flops, transcendentals=transcendentals,
                           bytes_accessed=bytes_accessed)

    packed = pl.pallas_call(
        kernel,
        grid=grid,
        in_specs=in_specs,
        out_specs=out_specs,
        out_shape=out_shape,
        cost_estimate=cost,
        compiler_params=pltpu.CompilerParams(
            dimension_semantics=("parallel",),
        ),
    )(
        slab,
        w_in_t, b_in_t,
        w_hid_t, b_hid_t,
        w_out_t, b_out_t,
        w_cal_t, b_cal_t,
    )

    packed = packed[:, :N]
    p_cal = packed[:K, :].T
    p_bar = packed[K:2 * K, :].T
    weights_l = packed[2 * K:, :].T
    return p_cal, p_bar, weights_l


# ---------------------------------------------------------------------------
# Pure-JAX reference (same math) for a sanity check
# ---------------------------------------------------------------------------
def reference(x, p_preds, params, hidden_layers):
    h = jnp.maximum(x @ params["w_in"] + params["b_in"], 0.0)
    for l in range(hidden_layers):
        h = jnp.maximum(h @ params["w_hid"][l] + params["b_hid"][l], 0.0)
    logits = h @ params["w_out"] + params["b_out"]
    weights_l = jax.nn.softmax(logits, axis=-1)
    p_bar = jnp.einsum("nm,nmk->nk", weights_l, p_preds)
    z = jnp.log(p_bar + 1e-12) @ params["w_cal"] + params["b_cal"]
    p_cal = jax.nn.softmax(z, axis=-1)
    return p_cal, p_bar, weights_l


# ---------------------------------------------------------------------------
# Main
# ---------------------------------------------------------------------------
if __name__ == "__main__":
    # Shapes consistent with the module's constructor args; batch large enough
    # to exercise the tiled path (tile_b=256, grid of 2) but still tiny overall.
    N = 512
    in_channels = 16
    n_classes = 10
    n_ensembles = 4
    hidden_dim = 32
    hidden_layers = 2

    key = jax.random.PRNGKey(0)
    keys = jax.random.split(key, 10)

    # Deterministic parameter init (synthetic; no checkpoint loading).
    params = {
        "w_in": 0.1 * jax.random.normal(keys[0], (in_channels, hidden_dim), jnp.float32),
        "b_in": jnp.zeros((1, hidden_dim), jnp.float32),
        "w_hid": 0.1 * jax.random.normal(keys[1], (hidden_layers, hidden_dim, hidden_dim), jnp.float32),
        "b_hid": jnp.zeros((hidden_layers, 1, hidden_dim), jnp.float32),
        "w_out": 0.1 * jax.random.normal(keys[2], (hidden_dim, n_ensembles), jnp.float32),
        "b_out": jnp.zeros((1, n_ensembles), jnp.float32),
        "w_cal": jnp.eye(n_classes, dtype=jnp.float32)
                 + 0.05 * jax.random.normal(keys[3], (n_classes, n_classes), jnp.float32),
        "b_cal": jnp.zeros((1, n_classes), jnp.float32),
    }

    # Inputs.
    x = jax.random.normal(keys[4], (N, in_channels), jnp.float32)
    p_preds = jax.nn.softmax(
        jax.random.normal(keys[5], (N, n_ensembles, n_classes), jnp.float32), axis=-1
    )

    p_cal_r, p_bar_r, weights_r = reference(x, p_preds, params, hidden_layers)

    # f32 streaming path: tight correctness check (1e-3 covers the approximate
    # EUP reciprocals used for the softmax normalizations).
    p_cal, p_bar, weights_l = credal_set_calibrator(
        x, p_preds, params, hidden_layers=hidden_layers
    )
    jax.block_until_ready((p_cal, p_bar, weights_l))
    assert jnp.allclose(p_cal, p_cal_r, atol=1e-3, rtol=1e-3)
    assert jnp.allclose(p_bar, p_bar_r, atol=1e-3, rtol=1e-3)
    assert jnp.allclose(weights_l, weights_r, atol=1e-3, rtol=1e-3)

    # bf16 streaming path (recommended default on v6e/v7x): halves HBM bytes,
    # native bf16 MXU; looser tolerance since activations cross layer
    # boundaries in bf16 while accumulation/softmax/log stay f32.
    p_cal_b, p_bar_b, weights_b = credal_set_calibrator(
        x, p_preds, params, hidden_layers=hidden_layers, input_dtype=jnp.bfloat16
    )
    jax.block_until_ready((p_cal_b, p_bar_b, weights_b))
    assert jnp.allclose(p_cal_b, p_cal_r, atol=5e-2, rtol=5e-2)
    assert jnp.allclose(p_bar_b, p_bar_r, atol=5e-2, rtol=5e-2)
    assert jnp.allclose(weights_b, weights_r, atol=5e-2, rtol=5e-2)

    print("KERNEL_OK")
</pallas_src>

<mosaic_0001>
module attributes {stable_mosaic.version = 11 : i64} {
  func.func @_credal_kernel(%arg0: i32, %arg1: memref<56x256xf32, #tpu.memory_space<vmem>>, %arg2: memref<32x16xf32, #tpu.memory_space<vmem>>, %arg3: memref<32x1xf32, #tpu.memory_space<vmem>>, %arg4: memref<2x32x32xf32, #tpu.memory_space<vmem>>, %arg5: memref<2x32x1xf32, #tpu.memory_space<vmem>>, %arg6: memref<4x32xf32, #tpu.memory_space<vmem>>, %arg7: memref<4x1xf32, #tpu.memory_space<vmem>>, %arg8: memref<10x10xf32, #tpu.memory_space<vmem>>, %arg9: memref<10x1xf32, #tpu.memory_space<vmem>>, %arg10: memref<24x256xf32, #tpu.memory_space<vmem>>) attributes {dimension_semantics = [#tpu.dimension_semantics<parallel>], iteration_bounds = array<i64: 2>, scalar_prefetch = 0 : i64, scratch_operands = 0 : i64, tpu.core_type = #tpu.core_type<tc>, window_params = [{transform_indices = @transform_0, window_bounds = array<i64: 56, 256>}, {pipeline_mode = #tpu.pipeline_mode<synchronous>, transform_indices = @transform_1, window_bounds = array<i64: 32, 16>}, {pipeline_mode = #tpu.pipeline_mode<synchronous>, transform_indices = @transform_2, window_bounds = array<i64: 32, 1>}, {pipeline_mode = #tpu.pipeline_mode<synchronous>, transform_indices = @transform_3, window_bounds = array<i64: 2, 32, 32>}, {pipeline_mode = #tpu.pipeline_mode<synchronous>, transform_indices = @transform_4, window_bounds = array<i64: 2, 32, 1>}, {pipeline_mode = #tpu.pipeline_mode<synchronous>, transform_indices = @transform_5, window_bounds = array<i64: 4, 32>}, {pipeline_mode = #tpu.pipeline_mode<synchronous>, transform_indices = @transform_6, window_bounds = array<i64: 4, 1>}, {pipeline_mode = #tpu.pipeline_mode<synchronous>, transform_indices = @transform_7, window_bounds = array<i64: 10, 10>}, {pipeline_mode = #tpu.pipeline_mode<synchronous>, transform_indices = @transform_8, window_bounds = array<i64: 10, 1>}, {transform_indices = @transform_9, window_bounds = array<i64: 24, 256>}]} {
    %c0 = arith.constant 0 : index
    %c0_0 = arith.constant 0 : index
    %0 = vector.load %arg1[%c0, %c0_0] : memref<56x256xf32, #tpu.memory_space<vmem>>, vector<56x256xf32>
    %1 = vector.extract_strided_slice %0 {offsets = [0, 0], sizes = [16, 256], strides = [1, 1]} : vector<56x256xf32> to vector<16x256xf32>
    %2 = vector.extract_strided_slice %0 {offsets = [16, 0], sizes = [40, 256], strides = [1, 1]} : vector<56x256xf32> to vector<40x256xf32>
    %c0_1 = arith.constant 0 : index
    %c0_2 = arith.constant 0 : index
    %3 = vector.load %arg2[%c0_1, %c0_2] : memref<32x16xf32, #tpu.memory_space<vmem>>, vector<32x16xf32>
    %cst = arith.constant dense<0.000000e+00> : vector<32x256xf32>
    %4 = tpu.matmul %3, %1, %cst {dimension_numbers = #tpu.dot_dimension_numbers<[1], [0], [0], [1], [0, 0, 1, 1], [], []>} : vector<32x16xf32>, vector<16x256xf32>, vector<32x256xf32> -> vector<32x256xf32>
    %c0_3 = arith.constant 0 : index
    %c0_4 = arith.constant 0 : index
    %5 = vector.load %arg3[%c0_3, %c0_4] : memref<32x1xf32, #tpu.memory_space<vmem>>, vector<32x1xf32>
    %6 = vector.broadcast %5 : vector<32x1xf32> to vector<32x256xf32>
    %7 = arith.addf %4, %6 : vector<32x256xf32>
    %cst_5 = arith.constant 0.000000e+00 : f32
    %8 = vector.broadcast %cst_5 : f32 to vector<32x256xf32>
    %9 = arith.maximumf %7, %8 : vector<32x256xf32>
    %c0_6 = arith.constant 0 : index
    %c0_7 = arith.constant 0 : index
    %c0_8 = arith.constant 0 : index
    %10 = vector.load %arg4[%c0_6, %c0_7, %c0_8] : memref<2x32x32xf32, #tpu.memory_space<vmem>>, vector<1x32x32xf32>
    %11 = vector.shape_cast %10 : vector<1x32x32xf32> to vector<32x32xf32>
    %cst_9 = arith.constant dense<0.000000e+00> : vector<32x256xf32>
    %12 = tpu.matmul %11, %9, %cst_9 {dimension_numbers = #tpu.dot_dimension_numbers<[1], [0], [0], [1], [0, 0, 1, 1], [], []>} : vector<32x32xf32>, vector<32x256xf32>, vector<32x256xf32> -> vector<32x256xf32>
    %c0_10 = arith.constant 0 : index
    %c0_11 = arith.constant 0 : index
    %c0_12 = arith.constant 0 : index
    %13 = vector.load %arg5[%c0_10, %c0_11, %c0_12] : memref<2x32x1xf32, #tpu.memory_space<vmem>>, vector<1x32x1xf32>
    %14 = vector.shape_cast %13 : vector<1x32x1xf32> to vector<32x1xf32>
    %15 = vector.broadcast %14 : vector<32x1xf32> to vector<32x256xf32>
    %16 = arith.addf %12, %15 : vector<32x256xf32>
    %cst_13 = arith.constant 0.000000e+00 : f32
    %17 = vector.broadcast %cst_13 : f32 to vector<32x256xf32>
    %18 = arith.maximumf %16, %17 : vector<32x256xf32>
    %c1 = arith.constant 1 : index
    %c0_14 = arith.constant 0 : index
    %c0_15 = arith.constant 0 : index
    %19 = vector.load %arg4[%c1, %c0_14, %c0_15] : memref<2x32x32xf32, #tpu.memory_space<vmem>>, vector<1x32x32xf32>
    %20 = vector.shape_cast %19 : vector<1x32x32xf32> to vector<32x32xf32>
    %cst_16 = arith.constant dense<0.000000e+00> : vector<32x256xf32>
    %21 = tpu.matmul %20, %18, %cst_16 {dimension_numbers = #tpu.dot_dimension_numbers<[1], [0], [0], [1], [0, 0, 1, 1], [], []>} : vector<32x32xf32>, vector<32x256xf32>, vector<32x256xf32> -> vector<32x256xf32>
    %c1_17 = arith.constant 1 : index
    %c0_18 = arith.constant 0 : index
    %c0_19 = arith.constant 0 : index
    %22 = vector.load %arg5[%c1_17, %c0_18, %c0_19] : memref<2x32x1xf32, #tpu.memory_space<vmem>>, vector<1x32x1xf32>
    %23 = vector.shape_cast %22 : vector<1x32x1xf32> to vector<32x1xf32>
    %24 = vector.broadcast %23 : vector<32x1xf32> to vector<32x256xf32>
    %25 = arith.addf %21, %24 : vector<32x256xf32>
    %cst_20 = arith.constant 0.000000e+00 : f32
    %26 = vector.broadcast %cst_20 : f32 to vector<32x256xf32>
    %27 = arith.maximumf %25, %26 : vector<32x256xf32>
    %c0_21 = arith.constant 0 : index
    %c0_22 = arith.constant 0 : index
    %28 = vector.load %arg6[%c0_21, %c0_22] : memref<4x32xf32, #tpu.memory_space<vmem>>, vector<4x32xf32>
    %cst_23 = arith.constant dense<0.000000e+00> : vector<4x256xf32>
    %29 = tpu.matmul %28, %27, %cst_23 {dimension_numbers = #tpu.dot_dimension_numbers<[1], [0], [0], [1], [0, 0, 1, 1], [], []>} : vector<4x32xf32>, vector<32x256xf32>, vector<4x256xf32> -> vector<4x256xf32>
    %c0_24 = arith.constant 0 : index
    %c0_25 = arith.constant 0 : index
    %30 = vector.load %arg7[%c0_24, %c0_25] : memref<4x1xf32, #tpu.memory_space<vmem>>, vector<4x1xf32>
    %31 = vector.broadcast %30 : vector<4x1xf32> to vector<4x256xf32>
    %32 = arith.addf %29, %31 : vector<4x256xf32>
    %cst_26 = arith.constant dense<0xFF800000> : vector<256xf32>
    %33 = vector.multi_reduction <maximumf>, %32, %cst_26 [0] : vector<4x256xf32> to vector<256xf32>
    %34 = vector.shape_cast %33 : vector<256xf32> to vector<1x256xf32>
    %35 = vector.broadcast %34 : vector<1x256xf32> to vector<4x256xf32>
    %36 = arith.subf %32, %35 : vector<4x256xf32>
    %37 = math.exp %36 : vector<4x256xf32>
    %cst_27 = arith.constant dense<0.000000e+00> : vector<256xf32>
    %38 = vector.multi_reduction <add>, %37, %cst_27 [0] : vector<4x256xf32> to vector<256xf32>
    %39 = vector.shape_cast %38 : vector<256xf32> to vector<1x256xf32>
    %40 = tpu.reciprocal %39 {approx = true} : vector<1x256xf32> -> vector<1x256xf32>
    %41 = vector.broadcast %40 : vector<1x256xf32> to vector<4x256xf32>
    %42 = arith.mulf %37, %41 : vector<4x256xf32>
    %cst_28 = arith.constant 0.000000e+00 : f32
    %43 = vector.broadcast %cst_28 : f32 to vector<10x256xf32>
    %44 = vector.extract_strided_slice %42 {offsets = [0, 0], sizes = [1, 256], strides = [1, 1]} : vector<4x256xf32> to vector<1x256xf32>
    %45 = vector.extract_strided_slice %2 {offsets = [0, 0], sizes = [10, 256], strides = [1, 1]} : vector<40x256xf32> to vector<10x256xf32>
    %46 = vector.broadcast %44 : vector<1x256xf32> to vector<10x256xf32>
    %47 = arith.mulf %46, %45 : vector<10x256xf32>
    %48 = arith.addf %43, %47 : vector<10x256xf32>
    %49 = vector.extract_strided_slice %42 {offsets = [1, 0], sizes = [1, 256], strides = [1, 1]} : vector<4x256xf32> to vector<1x256xf32>
    %50 = vector.extract_strided_slice %2 {offsets = [10, 0], sizes = [10, 256], strides = [1, 1]} : vector<40x256xf32> to vector<10x256xf32>
    %51 = vector.broadcast %49 : vector<1x256xf32> to vector<10x256xf32>
    %52 = arith.mulf %51, %50 : vector<10x256xf32>
    %53 = arith.addf %48, %52 : vector<10x256xf32>
    %54 = vector.extract_strided_slice %42 {offsets = [2, 0], sizes = [1, 256], strides = [1, 1]} : vector<4x256xf32> to vector<1x256xf32>
    %55 = vector.extract_strided_slice %2 {offsets = [20, 0], sizes = [10, 256], strides = [1, 1]} : vector<40x256xf32> to vector<10x256xf32>
    %56 = vector.broadcast %54 : vector<1x256xf32> to vector<10x256xf32>
    %57 = arith.mulf %56, %55 : vector<10x256xf32>
    %58 = arith.addf %53, %57 : vector<10x256xf32>
    %59 = vector.extract_strided_slice %42 {offsets = [3, 0], sizes = [1, 256], strides = [1, 1]} : vector<4x256xf32> to vector<1x256xf32>
    %60 = vector.extract_strided_slice %2 {offsets = [30, 0], sizes = [10, 256], strides = [1, 1]} : vector<40x256xf32> to vector<10x256xf32>
    %61 = vector.broadcast %59 : vector<1x256xf32> to vector<10x256xf32>
    %62 = arith.mulf %61, %60 : vector<10x256xf32>
    %63 = arith.addf %58, %62 : vector<10x256xf32>
    %c0_29 = arith.constant 0 : index
    %c0_30 = arith.constant 0 : index
    %64 = vector.load %arg8[%c0_29, %c0_30] : memref<10x10xf32, #tpu.memory_space<vmem>>, vector<10x10xf32>
    %cst_31 = arith.constant 9.99999996E-13 : f32
    %65 = vector.broadcast %cst_31 : f32 to vector<10x256xf32>
    %66 = arith.addf %63, %65 : vector<10x256xf32>
    %67 = math.log %66 : vector<10x256xf32>
    %cst_32 = arith.constant dense<0.000000e+00> : vector<10x256xf32>
    %68 = tpu.matmul %64, %67, %cst_32 {dimension_numbers = #tpu.dot_dimension_numbers<[1], [0], [0], [1], [0, 0, 1, 1], [], []>} : vector<10x10xf32>, vector<10x256xf32>, vector<10x256xf32> -> vector<10x256xf32>
    %c0_33 = arith.constant 0 : index
    %c0_34 = arith.constant 0 : index
    %69 = vector.load %arg9[%c0_33, %c0_34] : memref<10x1xf32, #tpu.memory_space<vmem>>, vector<10x1xf32>
    %70 = vector.broadcast %69 : vector<10x1xf32> to vector<10x256xf32>
    %71 = arith.addf %68, %70 : vector<10x256xf32>
    %cst_35 = arith.constant dense<0xFF800000> : vector<256xf32>
    %72 = vector.multi_reduction <maximumf>, %71, %cst_35 [0] : vector<10x256xf32> to vector<256xf32>
    %73 = vector.shape_cast %72 : vector<256xf32> to vector<1x256xf32>
    %74 = vector.broadcast %73 : vector<1x256xf32> to vector<10x256xf32>
    %75 = arith.subf %71, %74 : vector<10x256xf32>
    %76 = math.exp %75 : vector<10x256xf32>
    %cst_36 = arith.constant dense<0.000000e+00> : vector<256xf32>
    %77 = vector.multi_reduction <add>, %76, %cst_36 [0] : vector<10x256xf32> to vector<256xf32>
    %78 = vector.shape_cast %77 : vector<256xf32> to vector<1x256xf32>
    %79 = tpu.reciprocal %78 {approx = true} : vector<1x256xf32> -> vector<1x256xf32>
    %80 = vector.broadcast %79 : vector<1x256xf32> to vector<10x256xf32>
    %81 = arith.mulf %76, %80 : vector<10x256xf32>
    %c0_37 = arith.constant 0 : index
    %c0_38 = arith.constant 0 : index
    %82 = vector.load %arg10[%c0_37, %c0_38] : memref<24x256xf32, #tpu.memory_space<vmem>>, vector<10x256xf32>
    tpu.vector_store %arg10[%c0_37, %c0_38], %81 {strides = array<i32>} : memref<24x256xf32, #tpu.memory_space<vmem>>, vector<10x256xf32>,
    %c10 = arith.constant 10 : index
    %c0_39 = arith.constant 0 : index
    %83 = vector.load %arg10[%c10, %c0_39] : memref<24x256xf32, #tpu.memory_space<vmem>>, vector<10x256xf32>
    tpu.vector_store %arg10[%c10, %c0_39], %63 {strides = array<i32>} : memref<24x256xf32, #tpu.memory_space<vmem>>, vector<10x256xf32>,
    %c20 = arith.constant 20 : index
    %c0_40 = arith.constant 0 : index
    %84 = vector.load %arg10[%c20, %c0_40] : memref<24x256xf32, #tpu.memory_space<vmem>>, vector<4x256xf32>
    tpu.vector_store %arg10[%c20, %c0_40], %42 {strides = array<i32>} : memref<24x256xf32, #tpu.memory_space<vmem>>, vector<4x256xf32>,
    return
  }
  func.func @transform_0(%arg0: i32) -> (i32, i32) {
    %c0_i32 = arith.constant 0 : i32
    %c0_i32_0 = arith.constant 0 : i32
    return %c0_i32, %arg0 : i32, i32
  }
  func.func @transform_1(%arg0: i32) -> (i32, i32) {
    %c0_i32 = arith.constant 0 : i32
    %c0_i32_0 = arith.constant 0 : i32
    %c0_i32_1 = arith.constant 0 : i32
    return %c0_i32, %c0_i32_0 : i32, i32
  }
  func.func @transform_2(%arg0: i32) -> (i32, i32) {
    %c0_i32 = arith.constant 0 : i32
    %c0_i32_0 = arith.constant 0 : i32
    %c0_i32_1 = arith.constant 0 : i32
    return %c0_i32, %c0_i32_0 : i32, i32
  }
  func.func @transform_3(%arg0: i32) -> (i32, i32, i32) {
    %c0_i32 = arith.constant 0 : i32
    %c0_i32_0 = arith.constant 0 : i32
    %c0_i32_1 = arith.constant 0 : i32
    %c0_i32_2 = arith.constant 0 : i32
    return %c0_i32, %c0_i32_0, %c0_i32_1 : i32, i32, i32
  }
  func.func @transform_4(%arg0: i32) -> (i32, i32, i32) {
    %c0_i32 = arith.constant 0 : i32
    %c0_i32_0 = arith.constant 0 : i32
    %c0_i32_1 = arith.constant 0 : i32
    %c0_i32_2 = arith.constant 0 : i32
    return %c0_i32, %c0_i32_0, %c0_i32_1 : i32, i32, i32
  }
  func.func @transform_5(%arg0: i32) -> (i32, i32) {
    %c0_i32 = arith.constant 0 : i32
    %c0_i32_0 = arith.constant 0 : i32
    %c0_i32_1 = arith.constant 0 : i32
    return %c0_i32, %c0_i32_0 : i32, i32
  }
  func.func @transform_6(%arg0: i32) -> (i32, i32) {
    %c0_i32 = arith.constant 0 : i32
    %c0_i32_0 = arith.constant 0 : i32
    %c0_i32_1 = arith.constant 0 : i32
    return %c0_i32, %c0_i32_0 : i32, i32
  }
  func.func @transform_7(%arg0: i32) -> (i32, i32) {
    %c0_i32 = arith.constant 0 : i32
    %c0_i32_0 = arith.constant 0 : i32
    %c0_i32_1 = arith.constant 0 : i32
    return %c0_i32, %c0_i32_0 : i32, i32
  }
  func.func @transform_8(%arg0: i32) -> (i32, i32) {
    %c0_i32 = arith.constant 0 : i32
    %c0_i32_0 = arith.constant 0 : i32
    %c0_i32_1 = arith.constant 0 : i32
    return %c0_i32, %c0_i32_0 : i32, i32
  }
  func.func @transform_9(%arg0: i32) -> (i32, i32) {
    %c0_i32 = arith.constant 0 : i32
    %c0_i32_0 = arith.constant 0 : i32
    return %c0_i32, %arg0 : i32, i32
  }
}

</mosaic_0001>

<llo_original>
// kernel: tpu_custom_call.1
$region0: #{tpu_custom_call.1}
  #allocation0 [shape = 'u32[]', space=smem, size = 0x4, offset = 0x4, fixed_abs, tag = 'smem constant byte address 0x4 - core index']
  #allocation1 [shape = 'u32[72,128]{1,0:T(1,128)}', space=vmem, size = 0x9000, scoped, tag = 'internal scratch']
  %s0 = inlined_call_operand.hbm [shape: f32[56,512], index: 0, kind: input, shape index: {}]
  %s1 = inlined_call_operand.vmem [shape: f32[32,16], index: 1, kind: input, shape index: {}]
  %s2 = inlined_call_operand.vmem [shape: f32[32,1], index: 2, kind: input, shape index: {}]
  %s3 = inlined_call_operand.vmem [shape: f32[2,32,32], index: 3, kind: input, shape index: {}]
  %s4 = inlined_call_operand.vmem [shape: f32[2,32,1], index: 4, kind: input, shape index: {}]
  %s5 = inlined_call_operand.vmem [shape: f32[4,32], index: 5, kind: input, shape index: {}]
  %s6 = inlined_call_operand.vmem [shape: f32[4,1], index: 6, kind: input, shape index: {}]
  %s7 = inlined_call_operand.vmem [shape: f32[10,10], index: 7, kind: input, shape index: {}]
  %s8 = inlined_call_operand.vmem [shape: f32[10,1], index: 8, kind: input, shape index: {}]
  %s9 = inlined_call_operand.hbm [shape: f32[24,512], index: 9, kind: output, shape index: {}]
  %s10 = sld [smem:[#allocation0]]
  $region73: #{tpu_custom_call.1} parent=0
    _
  %s12 = ssub.s32 1, %s10
  %s13 = scalar_select 0, %s12, %s10
  $region1: #{tpu_custom_call.1} parent=0
    #allocation2 [shape = 'u8[114688]{0}', space=vmem, size = 0x1c000, scoped, tag = 'input window, operand 0']
    #allocation3 [shape = 's32[2]{0}', space=sflag, size = 0x8, scoped, tag = 'scoped memory for tpu_custom_call.1']
    #allocation4 [shape = 's32[2]{0}', space=sflag, size = 0x8, scoped, tag = 'scoped memory for tpu_custom_call.1']
    #allocation5 [shape = 'u8[49152]{0}', space=vmem, size = 0xc000, scoped, tag = 'output window, operand 0']
    %14 = vsyncpa [#allocation3], 0
    %s15 = scalar_lea.sflag [#allocation3], 1
    %16 = vsyncpa %s15, 0
    %17 = vsyncpa [#allocation4], 0
    %s18 = scalar_lea.sflag [#allocation4], 1
    %19 = vsyncpa %s18, 0
    loop: start=0, step=1, limit=4
    $region2: #{tpu_custom_call.1} parent=1 // loop_pre_header
      _
    $region3: #{tpu_custom_call.1} parent=1 // loop_header
      %s21 = sphi 0, %s25
      %p22 = scmp.ge.s32.totalorder %s21, 4
      %s31 = sphi 0, %s33
      %s34 = sphi 0, %s31
      %s35 = sphi 0, %s34
      %s51 = sphi 0, %s35
      %s55 = sphi 0, %s55
      %s57 = sphi 0, %s55
      %s58 = sphi 0, %s57
      %s72 = sphi 0, %s58
      %s76 = sphi 0, %s76
      %s78 = sphi 0, %s76
      %s79 = sphi 0, %s78
      %s93 = sphi 0, %s79
      %s97 = sphi 0, %s97
      %s99 = sphi 0, %s97
      %s100 = sphi 0, %s99
      %s114 = sphi 0, %s100
      %s118 = sphi 0, %s118
      %s120 = sphi 0, %s118
      %s121 = sphi 0, %s120
      %s135 = sphi 0, %s121
      %s139 = sphi 0, %s139
      %s141 = sphi 0, %s139
      %s142 = sphi 0, %s141
      %s156 = sphi 0, %s142
      %s160 = sphi 0, %s160
      %s162 = sphi 0, %s160
      %s163 = sphi 0, %s162
      %s177 = sphi 0, %s163
      %s181 = sphi 0, %s181
      %s183 = sphi 0, %s181
      %s184 = sphi 0, %s183
      %s198 = sphi 0, %s184
      %s202 = sphi 0, %s202
      %s204 = sphi 0, %s202
      %s205 = sphi 0, %s204
      %s219 = sphi 0, %s205
      %s225 = sphi 0, %s227
      %s228 = sphi 0, %s225
      %s229 = sphi 0, %s228
      %s245 = sphi 0, %s229
    $region4: #{tpu_custom_call.1} parent=1 // loop_header_branch
      %24 = sbr.rel (%p22) target = $region8
    $region5: #{tpu_custom_call.1} parent=1 // loop_body
      %s26 = ssub.s32 %s21, 1
      %s27 = ssub.s32 %s21, 2
      %s28 = sadd.s32 %s21, 1
      %s29 = ssub.s32 %s21, %s28
      %p30 = scmp.eq.s32.totalorder %s29, 0
      %s32 = sadd.s32 %s31, 1
      %s33 = scalar_select %p30, %s31, %s32
      %p36 = pneg %p30
      %p37 = scmp.eq.s32.totalorder %s21, 1
      %p38 = por %p36, %p37
      %p39 = scmp.ne.s32.totalorder %s31, %s34
      %p40 = scmp.eq.s32.totalorder %s21, 0
      %p41 = por %p39, %p40
      %p42 = scmp.ne.s32.totalorder %s31, %s34
      %p43 = scmp.eq.s32.totalorder %s26, 1
      %p44 = por %p42, %p43
      %p45 = scmp.ne.s32.totalorder %s34, %s35
      %p46 = scmp.eq.s32.totalorder %s26, 0
      %p47 = por %p45, %p46
      %p48 = scmp.ne.s32.totalorder %s34, %s35
      %p49 = scmp.eq.s32.totalorder %s27, 1
      %p50 = por %p48, %p49
      %p52 = scmp.ne.s32.totalorder %s35, %s51
      %p53 = scmp.eq.s32.totalorder %s27, 0
      %p54 = por %p52, %p53
      %s56 = sadd.s32 %s55, 1
      %p59 = scmp.eq.s32.totalorder %s21, 1
      %p60 = scmp.ne.s32.totalorder %s55, %s57
      %p61 = scmp.eq.s32.totalorder %s21, 0
      %p62 = por %p60, %p61
      %p63 = scmp.ne.s32.totalorder %s55, %s57
      %p64 = scmp.eq.s32.totalorder %s26, 1
      %p65 = por %p63, %p64
      %p66 = scmp.ne.s32.totalorder %s57, %s58
      %p67 = scmp.eq.s32.totalorder %s26, 0
      %p68 = por %p66, %p67
      %p69 = scmp.ne.s32.totalorder %s57, %s58
      %p70 = scmp.eq.s32.totalorder %s27, 1
      %p71 = por %p69, %p70
      %p73 = scmp.ne.s32.totalorder %s58, %s72
      %p74 = scmp.eq.s32.totalorder %s27, 0
      %p75 = por %p73, %p74
      %s77 = sadd.s32 %s76, 1
      %p80 = scmp.eq.s32.totalorder %s21, 1
      %p81 = scmp.ne.s32.totalorder %s76, %s78
      %p82 = scmp.eq.s32.totalorder %s21, 0
      %p83 = por %p81, %p82
      %p84 = scmp.ne.s32.totalorder %s76, %s78
      %p85 = scmp.eq.s32.totalorder %s26, 1
      %p86 = por %p84, %p85
      %p87 = scmp.ne.s32.totalorder %s78, %s79
      %p88 = scmp.eq.s32.totalorder %s26, 0
      %p89 = por %p87, %p88
      %p90 = scmp.ne.s32.totalorder %s78, %s79
      %p91 = scmp.eq.s32.totalorder %s27, 1
      %p92 = por %p90, %p91
      %p94 = scmp.ne.s32.totalorder %s79, %s93
      %p95 = scmp.eq.s32.totalorder %s27, 0
      %p96 = por %p94, %p95
      %s98 = sadd.s32 %s97, 1
      %p101 = scmp.eq.s32.totalorder %s21, 1
      %p102 = scmp.ne.s32.totalorder %s97, %s99
      %p103 = scmp.eq.s32.totalorder %s21, 0
      %p104 = por %p102, %p103
      %p105 = scmp.ne.s32.totalorder %s97, %s99
      %p106 = scmp.eq.s32.totalorder %s26, 1
      %p107 = por %p105, %p106
      %p108 = scmp.ne.s32.totalorder %s99, %s100
      %p109 = scmp.eq.s32.totalorder %s26, 0
      %p110 = por %p108, %p109
      %p111 = scmp.ne.s32.totalorder %s99, %s100
      %p112 = scmp.eq.s32.totalorder %s27, 1
      %p113 = por %p111, %p112
      %p115 = scmp.ne.s32.totalorder %s100, %s114
      %p116 = scmp.eq.s32.totalorder %s27, 0
      %p117 = por %p115, %p116
      %s119 = sadd.s32 %s118, 1
      %p122 = scmp.eq.s32.totalorder %s21, 1
      %p123 = scmp.ne.s32.totalorder %s118, %s120
      %p124 = scmp.eq.s32.totalorder %s21, 0
      %p125 = por %p123, %p124
      %p126 = scmp.ne.s32.totalorder %s118, %s120
      %p127 = scmp.eq.s32.totalorder %s26, 1
      %p128 = por %p126, %p127
      %p129 = scmp.ne.s32.totalorder %s120, %s121
      %p130 = scmp.eq.s32.totalorder %s26, 0
      %p131 = por %p129, %p130
      %p132 = scmp.ne.s32.totalorder %s120, %s121
      %p133 = scmp.eq.s32.totalorder %s27, 1
      %p134 = por %p132, %p133
      %p136 = scmp.ne.s32.totalorder %s121, %s135
      %p137 = scmp.eq.s32.totalorder %s27, 0
      %p138 = por %p136, %p137
      %s140 = sadd.s32 %s139, 1
      %p143 = scmp.eq.s32.totalorder %s21, 1
      %p144 = scmp.ne.s32.totalorder %s139, %s141
      %p145 = scmp.eq.s32.totalorder %s21, 0
      %p146 = por %p144, %p145
      %p147 = scmp.ne.s32.totalorder %s139, %s141
      %p148 = scmp.eq.s32.totalorder %s26, 1
      %p149 = por %p147, %p148
      %p150 = scmp.ne.s32.totalorder %s141, %s142
      %p151 = scmp.eq.s32.totalorder %s26, 0
      %p152 = por %p150, %p151
      %p153 = scmp.ne.s32.totalorder %s141, %s142
      %p154 = scmp.eq.s32.totalorder %s27, 1
      %p155 = por %p153, %p154
      %p157 = scmp.ne.s32.totalorder %s142, %s156
      %p158 = scmp.eq.s32.totalorder %s27, 0
      %p159 = por %p157, %p158
      %s161 = sadd.s32 %s160, 1
      %p164 = scmp.eq.s32.totalorder %s21, 1
      %p165 = scmp.ne.s32.totalorder %s160, %s162
      %p166 = scmp.eq.s32.totalorder %s21, 0
      %p167 = por %p165, %p166
      %p168 = scmp.ne.s32.totalorder %s160, %s162
      %p169 = scmp.eq.s32.totalorder %s26, 1
      %p170 = por %p168, %p169
      %p171 = scmp.ne.s32.totalorder %s162, %s163
      %p172 = scmp.eq.s32.totalorder %s26, 0
      %p173 = por %p171, %p172
      %p174 = scmp.ne.s32.totalorder %s162, %s163
      %p175 = scmp.eq.s32.totalorder %s27, 1
      %p176 = por %p174, %p175
      %p178 = scmp.ne.s32.totalorder %s163, %s177
      %p179 = scmp.eq.s32.totalorder %s27, 0
      %p180 = por %p178, %p179
      %s182 = sadd.s32 %s181, 1
      %p185 = scmp.eq.s32.totalorder %s21, 1
      %p186 = scmp.ne.s32.totalorder %s181, %s183
      %p187 = scmp.eq.s32.totalorder %s21, 0
      %p188 = por %p186, %p187
      %p189 = scmp.ne.s32.totalorder %s181, %s183
      %p190 = scmp.eq.s32.totalorder %s26, 1
      %p191 = por %p189, %p190
      %p192 = scmp.ne.s32.totalorder %s183, %s184
      %p193 = scmp.eq.s32.totalorder %s26, 0
      %p194 = por %p192, %p193
      %p195 = scmp.ne.s32.totalorder %s183, %s184
      %p196 = scmp.eq.s32.totalorder %s27, 1
      %p197 = por %p195, %p196
      %p199 = scmp.ne.s32.totalorder %s184, %s198
      %p200 = scmp.eq.s32.totalorder %s27, 0
      %p201 = por %p199, %p200
      %s203 = sadd.s32 %s202, 1
      %p206 = scmp.eq.s32.totalorder %s21, 1
      %p207 = scmp.ne.s32.totalorder %s202, %s204
      %p208 = scmp.eq.s32.totalorder %s21, 0
      %p209 = por %p207, %p208
      %p210 = scmp.ne.s32.totalorder %s202, %s204
      %p211 = scmp.eq.s32.totalorder %s26, 1
      %p212 = por %p210, %p211
      %p213 = scmp.ne.s32.totalorder %s204, %s205
      %p214 = scmp.eq.s32.totalorder %s26, 0
      %p215 = por %p213, %p214
      %p216 = scmp.ne.s32.totalorder %s204, %s205
      %p217 = scmp.eq.s32.totalorder %s27, 1
      %p218 = por %p216, %p217
      %p220 = scmp.ne.s32.totalorder %s205, %s219
      %p221 = scmp.eq.s32.totalorder %s27, 0
      %p222 = por %p220, %p221
      %s223 = ssub.s32 %s21, %s28
      %p224 = scmp.eq.s32.totalorder %s223, 0
      %s226 = sadd.s32 %s225, 1
      %s227 = scalar_select %p224, %s225, %s226
      %p230 = pneg %p224
      %p231 = scmp.eq.s32.totalorder %s21, 1
      %p232 = por %p230, %p231
      %p233 = scmp.ne.s32.totalorder %s225, %s228
      %p234 = scmp.eq.s32.totalorder %s21, 0
      %p235 = por %p233, %p234
      %p236 = scmp.ne.s32.totalorder %s225, %s228
      %p237 = scmp.eq.s32.totalorder %s26, 1
      %p238 = por %p236, %p237
      %p239 = scmp.ne.s32.totalorder %s228, %s229
      %p240 = scmp.eq.s32.totalorder %s26, 0
      %p241 = por %p239, %p240
      %p242 = scmp.ne.s32.totalorder %s228, %s229
      %p243 = scmp.eq.s32.totalorder %s27, 1
      %p244 = por %p242, %p243
      %p246 = scmp.ne.s32.totalorder %s229, %s245
      %p247 = scmp.eq.s32.totalorder %s27, 0
      %p248 = por %p246, %p247
      %p249 = scmp.le.s32.totalorder 1, %s21
      %p250 = scmp.lt.s32.totalorder %s21, 3
      %p251 = pnand %p249, %p250
      %p252 = pneg %p251
      // Predicated region
      $region9: #{tpu_custom_call.1} parent=5 // pred_check
        _
      $region10: #{tpu_custom_call.1} parent=5 // pred_check_branch
        %254 = sbr.rel (%p251) target = $region12
      $region11: #{tpu_custom_call.1} parent=5 // pred_region
        %s255 = ssub.s32 %s21, 1
        // Predicated region
        $region13: #{tpu_custom_call.1} parent=11 // pred_check
          %p256 = pneg %p68
        $region14: #{tpu_custom_call.1} parent=11 // pred_check_branch
          %258 = sbr.rel (%p256) target = $region16
        $region15: #{tpu_custom_call.1} parent=11 // pred_region
          _
        $region16: #{tpu_custom_call.1} parent=11 // pred_fallthru
          _
        // Predicated region
        $region17: #{tpu_custom_call.1} parent=11 // pred_check
          %p259 = pneg %p89
        $region18: #{tpu_custom_call.1} parent=11 // pred_check_branch
          %261 = sbr.rel (%p259) target = $region20
        $region19: #{tpu_custom_call.1} parent=11 // pred_region
          _
        $region20: #{tpu_custom_call.1} parent=11 // pred_fallthru
          _
        // Predicated region
        $region21: #{tpu_custom_call.1} parent=11 // pred_check
          %p262 = pneg %p110
        $region22: #{tpu_custom_call.1} parent=11 // pred_check_branch
          %264 = sbr.rel (%p262) target = $region24
        $region23: #{tpu_custom_call.1} parent=11 // pred_region
          _
        $region24: #{tpu_custom_call.1} parent=11 // pred_fallthru
          _
        // Predicated region
        $region25: #{tpu_custom_call.1} parent=11 // pred_check
          %p265 = pneg %p131
        $region26: #{tpu_custom_call.1} parent=11 // pred_check_branch
          %267 = sbr.rel (%p265) target = $region28
        $region27: #{tpu_custom_call.1} parent=11 // pred_region
          _
        $region28: #{tpu_custom_call.1} parent=11 // pred_fallthru
          _
        // Predicated region
        $region29: #{tpu_custom_call.1} parent=11 // pred_check
          %p268 = pneg %p152
        $region30: #{tpu_custom_call.1} parent=11 // pred_check_branch
          %270 = sbr.rel (%p268) target = $region32
        $region31: #{tpu_custom_call.1} parent=11 // pred_region
          _
        $region32: #{tpu_custom_call.1} parent=11 // pred_fallthru
          _
        // Predicated region
        $region33: #{tpu_custom_call.1} parent=11 // pred_check
          %p271 = pneg %p173
        $region34: #{tpu_custom_call.1} parent=11 // pred_check_branch
          %273 = sbr.rel (%p271) target = $region36
        $region35: #{tpu_custom_call.1} parent=11 // pred_region
          _
        $region36: #{tpu_custom_call.1} parent=11 // pred_fallthru
          _
        // Predicated region
        $region37: #{tpu_custom_call.1} parent=11 // pred_check
          %p274 = pneg %p194
        $region38: #{tpu_custom_call.1} parent=11 // pred_check_branch
          %276 = sbr.rel (%p274) target = $region40
        $region39: #{tpu_custom_call.1} parent=11 // pred_region
          _
        $region40: #{tpu_custom_call.1} parent=11 // pred_fallthru
          _
        // Predicated region
        $region41: #{tpu_custom_call.1} parent=11 // pred_check
          %p277 = pneg %p215
        $region42: #{tpu_custom_call.1} parent=11 // pred_check_branch
          %279 = sbr.rel (%p277) target = $region44
        $region43: #{tpu_custom_call.1} parent=11 // pred_region
          _
        $region44: #{tpu_custom_call.1} parent=11 // pred_fallthru
          _
      $region12: #{tpu_custom_call.1} parent=5 // pred_fallthru
        _
      %p280 = scmp.lt.s32.totalorder %s21, 2
      // Predicated region
      $region45: #{tpu_custom_call.1} parent=5 // pred_check
        %p281 = pneg %p280
      $region46: #{tpu_custom_call.1} parent=5 // pred_check_branch
        %283 = sbr.rel (%p281) target = $region48
      $region47: #{tpu_custom_call.1} parent=5 // pred_region
        // Predicated region
        $region49: #{tpu_custom_call.1} parent=47 // pred_check
          %p284 = pneg %p41
        $region50: #{tpu_custom_call.1} parent=47 // pred_check_branch
          %286 = sbr.rel (%p284) target = $region52
        $region51: #{tpu_custom_call.1} parent=47 // pred_region
          %s287 = sand.u32 %s31, 1
          %s288 = scalar_lea.sflag [#allocation3], %s287
          %s289 = sand.u32 %s31, 1
          %s290 = smul.addr %s289, 112
          %s291 = scalar_lea.vmem [#allocation2], %s290
          %s292 = smul.u32 2, %s21
          %294 = vsyncadd %s288, 0
          %s295 = smul.addr %s292, 8
          %s296 = scalar_lea.hbm %s0, %s295
          %s297 = sshll.u32 %s296, 4
          %s298 = int_to_ptr.hbm [resolvable:$true] %s297
          %s299 = sshll.u32 %s291, 4
          %s300 = int_to_ptr.vmem [resolvable:$true] %s299
          %305 = dma.hbm_to_vmem [thread:$0]  %s298, 1792, %s300, %s288, 512, 256, 16
        $region52: #{tpu_custom_call.1} parent=47 // pred_fallthru
          _
      $region48: #{tpu_custom_call.1} parent=5 // pred_fallthru
        _
      %p306 = scmp.le.s32.totalorder 1, %s21
      %p307 = scmp.lt.s32.totalorder %s21, 3
      %p308 = pnand %p306, %p307
      %p309 = pneg %p308
      // Predicated region
      $region53: #{tpu_custom_call.1} parent=5 // pred_check
        _
      $region54: #{tpu_custom_call.1} parent=5 // pred_check_branch
        %311 = sbr.rel (%p308) target = $region56
      $region55: #{tpu_custom_call.1} parent=5 // pred_region
        %s312 = ssub.s32 %s21, 1
        %s313 = sand.u32 %s34, 1
        %s314 = scalar_lea.sflag [#allocation3], %s313
        %s315 = sand.u32 %s34, 1
        %s316 = smul.addr %s315, 112
        %s317 = scalar_lea.vmem [#allocation2], %s316
        // Predicated region
        $region57: #{tpu_custom_call.1} parent=55 // pred_check
          %p318 = pneg %p47
        $region58: #{tpu_custom_call.1} parent=55 // pred_check_branch
          %320 = sbr.rel (%p318) target = $region60
        $region59: #{tpu_custom_call.1} parent=55 // pred_region
          %322 = dma.done %s314, 1792
        $region60: #{tpu_custom_call.1} parent=55 // pred_fallthru
          _
        %s323 = sand.u32 %s34, 1
        %s324 = scalar_lea.sflag [#allocation3], %s323
        %s325 = sand.u32 %s34, 1
        %s326 = smul.addr %s325, 112
        %s327 = scalar_lea.vmem [#allocation2], %s326
        %p328 = pneg %p47
        %p329 = pneg %p44
        %p330 = pneg %p68
        %p331 = pneg %p65
        %p332 = pneg %p89
        %p333 = pneg %p86
        %p334 = pneg %p110
        %p335 = pneg %p107
        %p336 = pneg %p131
        %p337 = pneg %p128
        %p338 = pneg %p152
        %p339 = pneg %p149
        %p340 = pneg %p173
        %p341 = pneg %p170
        %p342 = pneg %p194
        %p343 = pneg %p191
        %p344 = pneg %p215
        %p345 = pneg %p212
        %p346 = pneg %p241
        %p347 = pneg %p238
        %s348 = sand.u32 %s228, 1
        %s349 = scalar_lea.sflag [#allocation4], %s348
        %s350 = sand.u32 %s228, 1
        %s351 = smul.addr %s350, 48
        %s352 = scalar_lea.vmem [#allocation5], %s351
        %s353 = smul.u32 2, %s26
        %s354 = smul.u32 2, %s26
        %v355 = vld [vmem:[%s317] sm:$0xff]
        %v356 = vld [vmem:[%s317 + $0x8] sm:$0xff]
        %v357 = vld [vmem:[%s317 + $0x10] sm:$0xff]
        %v358 = vld [vmem:[%s317 + $0x18] sm:$0xff]
        %v359 = vld [vmem:[%s317 + $0x20] sm:$0xff]
        %v360 = vld [vmem:[%s317 + $0x28] sm:$0xff]
        %v361 = vld [vmem:[%s317 + $0x30] sm:$0xff]
        %v362 = vld [vmem:[%s317 + $0x38] sm:$0xff]
        %v363 = vld [vmem:[%s317 + $0x40] sm:$0xff]
        %v364 = vld [vmem:[%s317 + $0x48] sm:$0xff]
        %v365 = vld [vmem:[%s317 + $0x50] sm:$0xff]
        %v366 = vld [vmem:[%s317 + $0x58] sm:$0xff]
        %v367 = vld [vmem:[%s317 + $0x60] sm:$0xff]
        %v368 = vld [vmem:[%s317 + $0x68] sm:$0xff]
        %v369 = vld [vmem:[%s1] sm:$0xff]
        %v370 = vld [vmem:[%s1 + $0x8] sm:$0xff]
        %v371 = vld [vmem:[%s1 + $0x10] sm:$0xff]
        %v372 = vld [vmem:[%s1 + $0x18] sm:$0xff]
        %v373 = vld [vmem:[%s2] sm:$0xff]
        %v374 = vld [vmem:[%s2 + $0x8] sm:$0xff]
        %v375 = vld [vmem:[%s2 + $0x10] sm:$0xff]
        %v376 = vld [vmem:[%s2 + $0x18] sm:$0xff]
        %378 = vset.pattern.permute.xlu0 0
        %379 = vperm.xlu0 %378, %v373
        %v380 = vpop.permute.xlu0 %379
        %383 = vset.pattern.permute.xlu0 0
        %384 = vperm.xlu0 %383, %v374
        %v385 = vpop.permute.xlu0 %384
        %388 = vset.pattern.permute.xlu0 0
        %389 = vperm.xlu0 %388, %v375
        %v390 = vpop.permute.xlu0 %389
        %393 = vset.pattern.permute.xlu0 0
        %394 = vperm.xlu0 %393, %v376
        %v395 = vpop.permute.xlu0 %394
        %vm397 = vcmask 130048
        %v399 = vsel %vm397, %v369, 0
        %v402 = vsel %vm397, %v370, 0
        %v405 = vsel %vm397, %v371, 0
        %v408 = vsel %vm397, %v372, 0
        %410 = vmatpush.msra.mxu0 0.0
        %411 = vmatpush.msra.mxu0 0.0
        %412 = vmatpush.msra.mxu0 0.0
        %413 = vmatpush.msra.mxu0 0.0
        %414 = vmatpush.msra.mxu0 0.0
        %415 = vmatpush.msra.mxu0 0.0
        %416 = vmatpush.msra.mxu0 0.0
        %417 = vmatpush.msra.mxu0 0.0
        %418 = vmatpush.msra.mxu0 0.0
        %419 = vmatpush.msra.mxu0 0.0
        %420 = vmatpush.msra.mxu0 0.0
        %421 = vmatpush.msra.mxu0 0.0
        %422 = vmatpush.msra.mxu0 0.0
        %423 = vmatpush.msra.mxu0 0.0
        %424 = vmatpush.msra.mxu0 %v357
        %425 = vmatpush.msra.mxu0 %v355
        %426 = vmatmul.f32.gmra.mxu0 %v399
        %v427 = vpop.f32.mrf.mxu0
        %v428 = vadd.f32 %v380, %v427
        %429 = vmatmul.f32.gmra.mxu0 %v402
        %v430 = vpop.f32.mrf.mxu0
        %v431 = vadd.f32 %v385, %v430
        %432 = vmatmul.f32.gmra.mxu0 %v405
        %v433 = vpop.f32.mrf.mxu0
        %v434 = vadd.f32 %v390, %v433
        %435 = vmatmul.f32.gmra.mxu0 %v408
        %v436 = vpop.f32.mrf.mxu0
        %v437 = vadd.f32 %v395, %v436
        %438 = vdwg.mxu0
        %439 = vmatpush.msra.mxu0 0.0
        %440 = vmatpush.msra.mxu0 0.0
        %441 = vmatpush.msra.mxu0 0.0
        %442 = vmatpush.msra.mxu0 0.0
        %443 = vmatpush.msra.mxu0 0.0
        %444 = vmatpush.msra.mxu0 0.0
        %445 = vmatpush.msra.mxu0 0.0
        %446 = vmatpush.msra.mxu0 0.0
        %447 = vmatpush.msra.mxu0 0.0
        %448 = vmatpush.msra.mxu0 0.0
        %449 = vmatpush.msra.mxu0 0.0
        %450 = vmatpush.msra.mxu0 0.0
        %451 = vmatpush.msra.mxu0 0.0
        %452 = vmatpush.msra.mxu0 0.0
        %453 = vmatpush.msra.mxu0 %v358
        %454 = vmatpush.msra.mxu0 %v356
        %455 = vmatmul.f32.gmra.mxu0 %v399
        %v456 = vpop.f32.mrf.mxu0
        %v457 = vadd.f32 %v380, %v456
        %458 = vmatmul.f32.gmra.mxu0 %v402
        %v459 = vpop.f32.mrf.mxu0
        %v460 = vadd.f32 %v385, %v459
        %461 = vmatmul.f32.gmra.mxu0 %v405
        %v462 = vpop.f32.mrf.mxu0
        %v463 = vadd.f32 %v390, %v462
        %464 = vmatmul.f32.gmra.mxu0 %v408
        %v465 = vpop.f32.mrf.mxu0
        %v466 = vadd.f32 %v395, %v465
        %467 = vdwg.mxu0
        %v468 = vmax.f32 %v428, 0.0
        %v469 = vmax.f32 %v457, 0.0
        %v470 = vmax.f32 %v431, 0.0
        %v471 = vmax.f32 %v460, 0.0
        %v472 = vmax.f32 %v434, 0.0
        %v473 = vmax.f32 %v463, 0.0
        %v474 = vmax.f32 %v437, 0.0
        %v475 = vmax.f32 %v466, 0.0
        %v476 = vld [vmem:[%s3] sm:$0xff]
        %v477 = vld [vmem:[%s3 + $0x8] sm:$0xff]
        %v478 = vld [vmem:[%s3 + $0x10] sm:$0xff]
        %v479 = vld [vmem:[%s3 + $0x18] sm:$0xff]
        %v480 = vld [vmem:[%s4] sm:$0xff]
        %v481 = vld [vmem:[%s4 + $0x8] sm:$0xff]
        %v482 = vld [vmem:[%s4 + $0x10] sm:$0xff]
        %v483 = vld [vmem:[%s4 + $0x18] sm:$0xff]
        %485 = vset.pattern.permute.xlu0 0
        %486 = vperm.xlu0 %485, %v480
        %v487 = vpop.permute.xlu0 %486
        %490 = vset.pattern.permute.xlu0 0
        %491 = vperm.xlu0 %490, %v481
        %v492 = vpop.permute.xlu0 %491
        %495 = vset.pattern.permute.xlu0 0
        %496 = vperm.xlu0 %495, %v482
        %v497 = vpop.permute.xlu0 %496
        %500 = vset.pattern.permute.xlu0 0
        %501 = vperm.xlu0 %500, %v483
        %v502 = vpop.permute.xlu0 %501
        %vm504 = vcmask 261120
        %v506 = vsel %vm504, %v476, 0
        %v509 = vsel %vm504, %v477, 0
        %v512 = vsel %vm504, %v478, 0
        %v515 = vsel %vm504, %v479, 0
        %517 = vmatpush.msra.mxu0 0.0
        %518 = vmatpush.msra.mxu0 0.0
        %519 = vmatpush.msra.mxu0 0.0
        %520 = vmatpush.msra.mxu0 0.0
        %521 = vmatpush.msra.mxu0 0.0
        %522 = vmatpush.msra.mxu0 0.0
        %523 = vmatpush.msra.mxu0 0.0
        %524 = vmatpush.msra.mxu0 0.0
        %525 = vmatpush.msra.mxu0 0.0
        %526 = vmatpush.msra.mxu0 0.0
        %527 = vmatpush.msra.mxu0 0.0
        %528 = vmatpush.msra.mxu0 0.0
        %529 = vmatpush.msra.mxu0 %v474
        %530 = vmatpush.msra.mxu0 %v472
        %531 = vmatpush.msra.mxu0 %v470
        %532 = vmatpush.msra.mxu0 %v468
        %533 = vmatmul.f32.gmra.mxu0 %v506
        %v534 = vpop.f32.mrf.mxu0
        %v535 = vadd.f32 %v487, %v534
        %536 = vmatmul.f32.gmra.mxu0 %v509
        %v537 = vpop.f32.mrf.mxu0
        %v538 = vadd.f32 %v492, %v537
        %539 = vmatmul.f32.gmra.mxu0 %v512
        %v540 = vpop.f32.mrf.mxu0
        %v541 = vadd.f32 %v497, %v540
        %542 = vmatmul.f32.gmra.mxu0 %v515
        %v543 = vpop.f32.mrf.mxu0
        %v544 = vadd.f32 %v502, %v543
        %545 = vdwg.mxu0
        %546 = vmatpush.msra.mxu0 0.0
        %547 = vmatpush.msra.mxu0 0.0
        %548 = vmatpush.msra.mxu0 0.0
        %549 = vmatpush.msra.mxu0 0.0
        %550 = vmatpush.msra.mxu0 0.0
        %551 = vmatpush.msra.mxu0 0.0
        %552 = vmatpush.msra.mxu0 0.0
        %553 = vmatpush.msra.mxu0 0.0
        %554 = vmatpush.msra.mxu0 0.0
        %555 = vmatpush.msra.mxu0 0.0
        %556 = vmatpush.msra.mxu0 0.0
        %557 = vmatpush.msra.mxu0 0.0
        %558 = vmatpush.msra.mxu0 %v475
        %559 = vmatpush.msra.mxu0 %v473
        %560 = vmatpush.msra.mxu0 %v471
        %561 = vmatpush.msra.mxu0 %v469
        %562 = vmatmul.f32.gmra.mxu0 %v506
        %v563 = vpop.f32.mrf.mxu0
        %v564 = vadd.f32 %v487, %v563
        %565 = vmatmul.f32.gmra.mxu0 %v509
        %v566 = vpop.f32.mrf.mxu0
        %v567 = vadd.f32 %v492, %v566
        %568 = vmatmul.f32.gmra.mxu0 %v512
        %v569 = vpop.f32.mrf.mxu0
        %v570 = vadd.f32 %v497, %v569
        %571 = vmatmul.f32.gmra.mxu0 %v515
        %v572 = vpop.f32.mrf.mxu0
        %v573 = vadd.f32 %v502, %v572
        %574 = vdwg.mxu0
        %v575 = vmax.f32 %v535, 0.0
        %v576 = vmax.f32 %v564, 0.0
        %v577 = vmax.f32 %v538, 0.0
        %v578 = vmax.f32 %v567, 0.0
        %v579 = vmax.f32 %v541, 0.0
        %v580 = vmax.f32 %v570, 0.0
        %v581 = vmax.f32 %v544, 0.0
        %v582 = vmax.f32 %v573, 0.0
        %s583 = scalar_lea.vmem %s3, 32
        %v584 = vld [vmem:[%s583] sm:$0xff]
        %v585 = vld [vmem:[%s583 + $0x8] sm:$0xff]
        %v586 = vld [vmem:[%s583 + $0x10] sm:$0xff]
        %v587 = vld [vmem:[%s583 + $0x18] sm:$0xff]
        %s588 = scalar_lea.vmem %s4, 32
        %v589 = vld [vmem:[%s588] sm:$0xff]
        %v590 = vld [vmem:[%s588 + $0x8] sm:$0xff]
        %v591 = vld [vmem:[%s588 + $0x10] sm:$0xff]
        %v592 = vld [vmem:[%s588 + $0x18] sm:$0xff]
        %594 = vset.pattern.permute.xlu0 0
        %595 = vperm.xlu0 %594, %v589
        %v596 = vpop.permute.xlu0 %595
        %599 = vset.pattern.permute.xlu0 0
        %600 = vperm.xlu0 %599, %v590
        %v601 = vpop.permute.xlu0 %600
        %604 = vset.pattern.permute.xlu0 0
        %605 = vperm.xlu0 %604, %v591
        %v606 = vpop.permute.xlu0 %605
        %609 = vset.pattern.permute.xlu0 0
        %610 = vperm.xlu0 %609, %v592
        %v611 = vpop.permute.xlu0 %610
        %v614 = vsel %vm504, %v584, 0
        %v617 = vsel %vm504, %v585, 0
        %v620 = vsel %vm504, %v586, 0
        %v623 = vsel %vm504, %v587, 0
        %625 = vmatpush.msra.mxu0 0.0
        %626 = vmatpush.msra.mxu0 0.0
        %627 = vmatpush.msra.mxu0 0.0
        %628 = vmatpush.msra.mxu0 0.0
        %629 = vmatpush.msra.mxu0 0.0
        %630 = vmatpush.msra.mxu0 0.0
        %631 = vmatpush.msra.mxu0 0.0
        %632 = vmatpush.msra.mxu0 0.0
        %633 = vmatpush.msra.mxu0 0.0
        %634 = vmatpush.msra.mxu0 0.0
        %635 = vmatpush.msra.mxu0 0.0
        %636 = vmatpush.msra.mxu0 0.0
        %637 = vmatpush.msra.mxu0 %v581
        %638 = vmatpush.msra.mxu0 %v579
        %639 = vmatpush.msra.mxu0 %v577
        %640 = vmatpush.msra.mxu0 %v575
        %641 = vmatmul.f32.gmra.mxu0 %v614
        %v642 = vpop.f32.mrf.mxu0
        %v643 = vadd.f32 %v596, %v642
        %644 = vmatmul.f32.gmra.mxu0 %v617
        %v645 = vpop.f32.mrf.mxu0
        %v646 = vadd.f32 %v601, %v645
        %647 = vmatmul.f32.gmra.mxu0 %v620
        %v648 = vpop.f32.mrf.mxu0
        %v649 = vadd.f32 %v606, %v648
        %650 = vmatmul.f32.gmra.mxu0 %v623
        %v651 = vpop.f32.mrf.mxu0
        %v652 = vadd.f32 %v611, %v651
        %653 = vdwg.mxu0
        %654 = vmatpush.msra.mxu0 0.0
        %655 = vmatpush.msra.mxu0 0.0
        %656 = vmatpush.msra.mxu0 0.0
        %657 = vmatpush.msra.mxu0 0.0
        %658 = vmatpush.msra.mxu0 0.0
        %659 = vmatpush.msra.mxu0 0.0
        %660 = vmatpush.msra.mxu0 0.0
        %661 = vmatpush.msra.mxu0 0.0
        %662 = vmatpush.msra.mxu0 0.0
        %663 = vmatpush.msra.mxu0 0.0
        %664 = vmatpush.msra.mxu0 0.0
        %665 = vmatpush.msra.mxu0 0.0
        %666 = vmatpush.msra.mxu0 %v582
        %667 = vmatpush.msra.mxu0 %v580
        %668 = vmatpush.msra.mxu0 %v578
        %669 = vmatpush.msra.mxu0 %v576
        %670 = vmatmul.f32.gmra.mxu0 %v614
        %v671 = vpop.f32.mrf.mxu0
        %v672 = vadd.f32 %v596, %v671
        %673 = vmatmul.f32.gmra.mxu0 %v617
        %v674 = vpop.f32.mrf.mxu0
        %v675 = vadd.f32 %v601, %v674
        %676 = vmatmul.f32.gmra.mxu0 %v620
        %v677 = vpop.f32.mrf.mxu0
        %v678 = vadd.f32 %v606, %v677
        %679 = vmatmul.f32.gmra.mxu0 %v623
        %v680 = vpop.f32.mrf.mxu0
        %v681 = vadd.f32 %v611, %v680
        %682 = vdwg.mxu0
        %v683 = vmax.f32 %v643, 0.0
        %v684 = vmax.f32 %v672, 0.0
        %v685 = vmax.f32 %v646, 0.0
        %v686 = vmax.f32 %v675, 0.0
        %v687 = vmax.f32 %v649, 0.0
        %v688 = vmax.f32 %v678, 0.0
        %v689 = vmax.f32 %v652, 0.0
        %v690 = vmax.f32 %v681, 0.0
        %v691 = vld [vmem:[%s5] sm:$0xf]
        %v692 = vld [vmem:[%s6] sm:$0xf]
        %694 = vset.pattern.permute.xlu0 0
        %695 = vperm.xlu0 %694, %v692
        %v696 = vpop.permute.xlu0 %695
        %v699 = vsel %vm504, %v691, 0
        %701 = vmatpush.msra.mxu0 0.0
        %702 = vmatpush.msra.mxu0 0.0
        %703 = vmatpush.msra.mxu0 0.0
        %704 = vmatpush.msra.mxu0 0.0
        %705 = vmatpush.msra.mxu0 0.0
        %706 = vmatpush.msra.mxu0 0.0
        %707 = vmatpush.msra.mxu0 0.0
        %708 = vmatpush.msra.mxu0 0.0
        %709 = vmatpush.msra.mxu0 0.0
        %710 = vmatpush.msra.mxu0 0.0
        %711 = vmatpush.msra.mxu0 0.0
        %712 = vmatpush.msra.mxu0 0.0
        %713 = vmatpush.msra.mxu0 %v689
        %714 = vmatpush.msra.mxu0 %v687
        %715 = vmatpush.msra.mxu0 %v685
        %716 = vmatpush.msra.mxu0 %v683
        %717 = vmatmul.f32.gmra.mxu0 %v699
        %v718 = vpop.f32.mrf.mxu0
        %v719 = vadd.f32 %v696, %v718
        %720 = vdwg.mxu0
        %721 = vmatpush.msra.mxu0 0.0
        %722 = vmatpush.msra.mxu0 0.0
        %723 = vmatpush.msra.mxu0 0.0
        %724 = vmatpush.msra.mxu0 0.0
        %725 = vmatpush.msra.mxu0 0.0
        %726 = vmatpush.msra.mxu0 0.0
        %727 = vmatpush.msra.mxu0 0.0
        %728 = vmatpush.msra.mxu0 0.0
        %729 = vmatpush.msra.mxu0 0.0
        %730 = vmatpush.msra.mxu0 0.0
        %731 = vmatpush.msra.mxu0 0.0
        %732 = vmatpush.msra.mxu0 0.0
        %733 = vmatpush.msra.mxu0 %v690
        %734 = vmatpush.msra.mxu0 %v688
        %735 = vmatpush.msra.mxu0 %v686
        %736 = vmatpush.msra.mxu0 %v684
        %737 = vmatmul.f32.gmra.mxu0 %v699
        %v738 = vpop.f32.mrf.mxu0
        %v739 = vadd.f32 %v696, %v738
        %740 = vdwg.mxu0
        %vm741 = vcmask 1043456
        %v742 = vsel %vm741, %v719, -inf
        %v743 = vrot.slane %v742, 4
        %v744 = vmax.f32 %v742, %v743
        %v745 = vrot.slane %v744, 2
        %v746 = vmax.f32 %v744, %v745
        %v747 = vrot.slane %v746, 1
        %v748 = vmax.f32 %v746, %v747
        %v749 = vsel %vm741, %v739, -inf
        %v750 = vrot.slane %v749, 4
        %v751 = vmax.f32 %v749, %v750
        %v752 = vrot.slane %v751, 2
        %v753 = vmax.f32 %v751, %v752
        %v754 = vrot.slane %v753, 1
        %v755 = vmax.f32 %v753, %v754
        %v756 = vsub.f32 %v719, %v748
        %v757 = vsub.f32 %v739, %v755
        %v758 = vmul.f32 %v756, 1.442695
        %v759 = vpow.pop %v758
        %v760 = vmul.f32 %v757, 1.442695
        %v761 = vpow.pop %v760
        %v762 = vsel %vm741, %v759, 0.0
        %v763 = vrot.slane %v762, 4
        %v764 = vadd.f32 %v762, %v763
        %v765 = vrot.slane %v764, 2
        %v766 = vadd.f32 %v764, %v765
        %v767 = vrot.slane %v766, 1
        %v768 = vadd.f32 %v766, %v767
        %v769 = vsel %vm741, %v761, 0.0
        %v770 = vrot.slane %v769, 4
        %v771 = vadd.f32 %v769, %v770
        %v772 = vrot.slane %v771, 2
        %v773 = vadd.f32 %v771, %v772
        %v774 = vrot.slane %v773, 1
        %v775 = vadd.f32 %v773, %v774
        %v776 = vrcp.pop %v768
        %v777 = vrcp.pop %v775
        %v778 = vmul.f32 %v759, %v776
        %v779 = vmul.f32 %v761, %v777
        %v780 = vperm.slane %v778, 0
        %v781 = vperm.slane %v779, 0
        %v782 = vmul.f32 %v780, %v359
        %v783 = vmul.f32 %v781, %v360
        %v784 = vmul.f32 %v780, %v361
        %v785 = vmul.f32 %v781, %v362
        %v786 = vadd.f32 %v782, 0.0
        %v787 = vadd.f32 %v783, 0.0
        %v788 = vadd.f32 %v784, 0.0
        %v789 = vadd.f32 %v785, 0.0
        %v790 = vperm.slane %v778, 1
        %v791 = vperm.slane %v779, 1
        %v792 = vmul.f32 %v790, %v361
        %v793 = vmul.f32 %v791, %v362
        %v794 = vmul.f32 %v790, %v363
        %v795 = vmul.f32 %v791, %v364
        %vm800 = vcmask 1045504
        %v801 = vrot.slane %v792, 2
        %v802 = vrot.slane %v794, 2
        %v803 = vsel %vm800, %v801, %v802
        %v804 = vrot.slane %v793, 2
        %v805 = vrot.slane %v795, 2
        %v806 = vsel %vm800, %v804, %v805
        %v811 = vadd.f32 %v786, %v803
        %v812 = vadd.f32 %v787, %v806
        %v813 = vadd.f32 %v788, %v802
        %v814 = vadd.f32 %v789, %v805
        %v815 = vperm.slane %v778, 2
        %v816 = vperm.slane %v779, 2
        %v817 = vmul.f32 %v815, %v363
        %v818 = vmul.f32 %v816, %v364
        %v819 = vmul.f32 %v815, %v365
        %v820 = vmul.f32 %v816, %v366
        %v825 = vrot.slane %v817, 4
        %v826 = vrot.slane %v819, 4
        %v827 = vsel %vm741, %v825, %v826
        %v828 = vrot.slane %v818, 4
        %v829 = vrot.slane %v820, 4
        %v830 = vsel %vm741, %v828, %v829
        %v835 = vadd.f32 %v811, %v827
        %v836 = vadd.f32 %v812, %v830
        %v837 = vadd.f32 %v813, %v826
        %v838 = vadd.f32 %v814, %v829
        %v839 = vperm.slane %v778, 3
        %v840 = vperm.slane %v779, 3
        %v841 = vmul.f32 %v839, %v365
        %v842 = vmul.f32 %v840, %v366
        %v843 = vmul.f32 %v839, %v367
        %v844 = vmul.f32 %v840, %v368
        %vm849 = vcmask 1041408
        %v850 = vrot.slane %v841, 6
        %v851 = vrot.slane %v843, 6
        %v852 = vsel %vm849, %v850, %v851
        %v853 = vrot.slane %v842, 6
        %v854 = vrot.slane %v844, 6
        %v855 = vsel %vm849, %v853, %v854
        %v860 = vadd.f32 %v835, %v852
        %v861 = vadd.f32 %v836, %v855
        %v862 = vadd.f32 %v837, %v851
        %v863 = vadd.f32 %v838, %v854
        %v864 = vld [vmem:[%s7] sm:$0xff]
        %v865 = vld [vmem:[%s7 + $0x8] sm:$0x3]
        %v866 = vadd.f32 %v860, 1e-12
        %v867 = vadd.f32 %v861, 1e-12
        %v868 = vadd.f32 %v862, 1e-12
        %v869 = vadd.f32 %v863, 1e-12
        %v870 = vlog2.pop %v866
        %v871 = vmul.f32 %v870, 0.6931472
        %v872 = vlog2.pop %v867
        %v873 = vmul.f32 %v872, 0.6931472
        %v874 = vlog2.pop %v868
        %v875 = vmul.f32 %v874, 0.6931472
        %v876 = vlog2.pop %v869
        %v877 = vmul.f32 %v876, 0.6931472
        %v878 = vld [vmem:[%s8] sm:$0xff]
        %v879 = vld [vmem:[%s8 + $0x8] sm:$0x3]
        %881 = vset.pattern.permute.xlu0 0
        %882 = vperm.xlu0 %881, %v878
        %v883 = vpop.permute.xlu0 %882
        %886 = vset.pattern.permute.xlu0 0
        %887 = vperm.xlu0 %886, %v879
        %v888 = vpop.permute.xlu0 %887
        %vm890 = vcmask 80896
        %v892 = vsel %vm890, %v864, 0
        %v895 = vsel %vm890, %v865, 0
        %v898 = vsel %vm849, %v875, 0
        %v901 = vsel %vm849, %v877, 0
        %903 = vmatpush.msra.mxu0 0.0
        %904 = vmatpush.msra.mxu0 0.0
        %905 = vmatpush.msra.mxu0 0.0
        %906 = vmatpush.msra.mxu0 0.0
        %907 = vmatpush.msra.mxu0 0.0
        %908 = vmatpush.msra.mxu0 0.0
        %909 = vmatpush.msra.mxu0 0.0
        %910 = vmatpush.msra.mxu0 0.0
        %911 = vmatpush.msra.mxu0 0.0
        %912 = vmatpush.msra.mxu0 0.0
        %913 = vmatpush.msra.mxu0 0.0
        %914 = vmatpush.msra.mxu0 0.0
        %915 = vmatpush.msra.mxu0 0.0
        %916 = vmatpush.msra.mxu0 0.0
        %917 = vmatpush.msra.mxu0 %v898
        %918 = vmatpush.msra.mxu0 %v871
        %919 = vmatmul.f32.gmra.mxu0 %v892
        %v920 = vpop.f32.mrf.mxu0
        %v921 = vadd.f32 %v883, %v920
        %922 = vmatmul.f32.gmra.mxu0 %v895
        %v923 = vpop.f32.mrf.mxu0
        %v924 = vadd.f32 %v888, %v923
        %925 = vdwg.mxu0
        %926 = vmatpush.msra.mxu0 0.0
        %927 = vmatpush.msra.mxu0 0.0
        %928 = vmatpush.msra.mxu0 0.0
        %929 = vmatpush.msra.mxu0 0.0
        %930 = vmatpush.msra.mxu0 0.0
        %931 = vmatpush.msra.mxu0 0.0
        %932 = vmatpush.msra.mxu0 0.0
        %933 = vmatpush.msra.mxu0 0.0
        %934 = vmatpush.msra.mxu0 0.0
        %935 = vmatpush.msra.mxu0 0.0
        %936 = vmatpush.msra.mxu0 0.0
        %937 = vmatpush.msra.mxu0 0.0
        %938 = vmatpush.msra.mxu0 0.0
        %939 = vmatpush.msra.mxu0 0.0
        %940 = vmatpush.msra.mxu0 %v901
        %941 = vmatpush.msra.mxu0 %v873
        %942 = vmatmul.f32.gmra.mxu0 %v892
        %v943 = vpop.f32.mrf.mxu0
        %v944 = vadd.f32 %v883, %v943
        %945 = vmatmul.f32.gmra.mxu0 %v895
        %v946 = vpop.f32.mrf.mxu0
        %v947 = vadd.f32 %v888, %v946
        %948 = vdwg.mxu0
        %v949 = vsel %vm849, %v924, -inf
        %v950 = vmax.f32 %v921, %v949
        %v951 = vrot.slane %v950, 4
        %v952 = vmax.f32 %v950, %v951
        %v953 = vrot.slane %v952, 2
        %v954 = vmax.f32 %v952, %v953
        %v955 = vrot.slane %v954, 1
        %v956 = vmax.f32 %v954, %v955
        %v957 = vsel %vm849, %v947, -inf
        %v958 = vmax.f32 %v944, %v957
        %v959 = vrot.slane %v958, 4
        %v960 = vmax.f32 %v958, %v959
        %v961 = vrot.slane %v960, 2
        %v962 = vmax.f32 %v960, %v961
        %v963 = vrot.slane %v962, 1
        %v964 = vmax.f32 %v962, %v963
        %v965 = vsub.f32 %v921, %v956
        %v966 = vsub.f32 %v944, %v964
        %v967 = vsub.f32 %v924, %v956
        %v968 = vsub.f32 %v947, %v964
        %v969 = vmul.f32 %v965, 1.442695
        %v970 = vpow.pop %v969
        %v971 = vmul.f32 %v966, 1.442695
        %v972 = vpow.pop %v971
        %v973 = vmul.f32 %v967, 1.442695
        %v974 = vpow.pop %v973
        %v975 = vmul.f32 %v968, 1.442695
        %v976 = vpow.pop %v975
        %v977 = vsel %vm849, %v974, 0.0
        %v978 = vadd.f32 %v970, %v977
        %v979 = vrot.slane %v978, 4
        %v980 = vadd.f32 %v978, %v979
        %v981 = vrot.slane %v980, 2
        %v982 = vadd.f32 %v980, %v981
        %v983 = vrot.slane %v982, 1
        %v984 = vadd.f32 %v982, %v983
        %v985 = vsel %vm849, %v976, 0.0
        %v986 = vadd.f32 %v972, %v985
        %v987 = vrot.slane %v986, 4
        %v988 = vadd.f32 %v986, %v987
        %v989 = vrot.slane %v988, 2
        %v990 = vadd.f32 %v988, %v989
        %v991 = vrot.slane %v990, 1
        %v992 = vadd.f32 %v990, %v991
        %v993 = vrcp.pop %v984
        %v994 = vrcp.pop %v992
        %v995 = vmul.f32 %v970, %v993
        %v996 = vmul.f32 %v972, %v994
        %v997 = vmul.f32 %v974, %v993
        %v998 = vmul.f32 %v976, %v994
        %999 = vst [vmem:[%s352] sm:$0xff] %v995
        %1000 = vst [vmem:[%s352 + $0x8] sm:$0xff] %v996
        %1001 = vst [vmem:[%s352 + $0x10] sm:$0x3] %v997
        %1002 = vst [vmem:[%s352 + $0x18] sm:$0x3] %v998
        %v1007 = vrot.slane %v860, 6
        %v1008 = vrot.slane %v861, 6
        %v1009 = vrot.slane %v862, 6
        %v1010 = vsel %vm849, %v1007, %v1009
        %v1011 = vrot.slane %v863, 6
        %v1012 = vsel %vm849, %v1008, %v1011
        %1017 = vst [vmem:[%s352 + $0x10] sm:$0xfc] %v1007
        %1018 = vst [vmem:[%s352 + $0x18] sm:$0xfc] %v1008
        %1019 = vst [vmem:[%s352 + $0x20] sm:$0xf] %v1010
        %1020 = vst [vmem:[%s352 + $0x28] sm:$0xf] %v1012
        %v1023 = vrot.slane %v778, 4
        %v1024 = vrot.slane %v779, 4
        %1027 = vst [vmem:[%s352 + $0x20] sm:$0xf0] %v1023
        %1028 = vst [vmem:[%s352 + $0x28] sm:$0xf0] %v1024
        %s1029 = sand.u32 %s228, 1
        %s1030 = scalar_lea.sflag [#allocation4], %s1029
        %s1031 = sand.u32 %s228, 1
        %s1032 = smul.addr %s1031, 48
        %s1033 = scalar_lea.vmem [#allocation5], %s1032
        // Predicated region
        $region61: #{tpu_custom_call.1} parent=55 // pred_check
          %p1034 = pneg %p238
        $region62: #{tpu_custom_call.1} parent=55 // pred_check_branch
          %1036 = sbr.rel (%p1034) target = $region64
        $region63: #{tpu_custom_call.1} parent=55 // pred_region
          %s1037 = smul.u32 2, %s26
          %1039 = vsyncadd %s1030, 0
          %s1040 = smul.addr %s1037, 8
          %s1041 = scalar_lea.hbm %s9, %s1040
          %s1042 = sshll.u32 %s1033, 4
          %s1043 = int_to_ptr.vmem [resolvable:$true] %s1042
          %s1044 = sshll.u32 %s1041, 4
          %s1045 = int_to_ptr.hbm [resolvable:$true] %s1044
          %1050 = dma.vmem_to_hbm [thread:$0]  %s1043, 768, %s1045, %s1030, 256, 512, 16
        $region64: #{tpu_custom_call.1} parent=55 // pred_fallthru
          _
      $region56: #{tpu_custom_call.1} parent=5 // pred_fallthru
        _
      %p1051 = scmp.le.s32.totalorder 2, %s21
      // Predicated region
      $region65: #{tpu_custom_call.1} parent=5 // pred_check
        %p1052 = pneg %p1051
      $region66: #{tpu_custom_call.1} parent=5 // pred_check_branch
        %1054 = sbr.rel (%p1052) target = $region68
      $region67: #{tpu_custom_call.1} parent=5 // pred_region
        %s1055 = ssub.s32 %s21, 2
        // Predicated region
        $region69: #{tpu_custom_call.1} parent=67 // pred_check
          %p1056 = pneg %p244
        $region70: #{tpu_custom_call.1} parent=67 // pred_check_branch
          %1058 = sbr.rel (%p1056) target = $region72
        $region71: #{tpu_custom_call.1} parent=67 // pred_region
          %s1059 = sand.u32 %s229, 1
          %s1060 = scalar_lea.sflag [#allocation4], %s1059
          %s1061 = sand.u32 %s229, 1
          %s1062 = smul.addr %s1061, 48
          %s1063 = scalar_lea.vmem [#allocation5], %s1062
          %1065 = dma.done %s1060, 768
        $region72: #{tpu_custom_call.1} parent=67 // pred_fallthru
          _
      $region68: #{tpu_custom_call.1} parent=5 // pred_fallthru
        _
    $region6: #{tpu_custom_call.1} parent=1 // loop_footer
      %s25 = sadd.s32 1, %s21
    $region7: #{tpu_custom_call.1} parent=1 // loop_footer_branch
      %20 = sbr.rel target = $region3
    $region8: #{tpu_custom_call.1} parent=1 // loop_exit
      _
    %1066 = vsyncpa [#allocation3], 1
    %s1067 = scalar_lea.sflag [#allocation3], 1
    %1068 = vsyncpa %s1067, 1
    %1069 = vsyncpa [#allocation4], 1
    %s1070 = scalar_lea.sflag [#allocation4], 1
    %1071 = vsyncpa %s1070, 1

</llo_original>
